<compile_context>
chip_gen: v6e
topology: v6e:2x2x1
jax: 0.10.0
libtpu: 0.0.40
codegen_flags: <defaults>
</compile_context>

<pallas_src>
import jax
import jax.numpy as jnp
from jax.experimental import pallas as pl
from jax.experimental.pallas import tpu as pltpu

IN_DIM = 784
IN_PAD = 896          # 784 rounded up to a multiple of 128
HID_DIM = 128
OUT_DIM = 10
OUT_PAD = 128         # lane-dense output (padded classes are masked + sliced off)


def _round_up(n, m):
    return (n + m - 1) // m * m


def mnist_mlp_kernel(x_ref, w1_ref, b1_ref, w2_ref, o_ref):
    # x_ref:  (TB, 896)   VMEM, bf16   (zero-padded features)
    # w1_ref: (896, 128)  VMEM, bf16   (fc1.weight.T, zero-padded rows)
    # b1_ref: (1, 128)    VMEM, f32    (fc1.bias)
    # w2_ref: (128, 128)  VMEM, f32    (fc2.weight.T, zero-padded columns)
    # o_ref:  (TB, 128)   VMEM, f32    (log-probs; cols >= 10 are padding)

    # fc1 (bf16 MXU matmul, f32 accumulation) + bias + tanh (EUP)
    h = jnp.dot(x_ref[...], w1_ref[...], preferred_element_type=jnp.float32)
    h = jnp.tanh(h + b1_ref[...])

    # Dropout: F.dropout(x, training=self.training) is identity in eval mode.
    # TODO(synk): training-mode dropout (stateful PRNG mask) not implemented.

    # fc2 (custom Linear forward adds NO bias)
    logits = jnp.dot(h, w2_ref[...], preferred_element_type=jnp.float32)

    # Mask the zero-padded class columns so they cannot perturb the normalizer.
    col = jax.lax.broadcasted_iota(jnp.int32, logits.shape, 1)
    logits = jnp.where(col < OUT_DIM, logits, jnp.float32(-1e30))

    # Numerically stable log_softmax over the (padded) class axis.
    m = jnp.max(logits, axis=-1, keepdims=True)
    shifted = logits - m
    lse = jnp.log(jnp.sum(jnp.exp(shifted), axis=-1, keepdims=True))
    o_ref[...] = (shifted - lse).astype(o_ref.dtype)


def mnist_mlp_forward(x, w1_t, b1, w2_t, tb=256):
    """x: (B, 1, 28, 28) or (B, 784) float32. Returns (B, 10) log-probs (f32).

    w1_t = fc1.weight.T (784, 128), b1 = fc1.bias (128,), w2_t = fc2.weight.T (128, 10).
    """
    B = x.shape[0]

    # Batch tile: multiple of 8 (sublane), capped at `tb`; pad B up to it.
    TB = min(tb, _round_up(B, 8))
    B_pad = _round_up(B, TB)
    num_tiles = B_pad // TB

    # --- wrapper-side packing (one-time for weights) ---
    x2d = x.reshape(B, IN_DIM).astype(jnp.bfloat16)
    x_p = jnp.pad(x2d, ((0, B_pad - B), (0, IN_PAD - IN_DIM)))          # (B_pad, 896) bf16
    w1_p = jnp.pad(w1_t.astype(jnp.bfloat16), ((0, IN_PAD - IN_DIM), (0, 0)))  # (896, 128) bf16
    b1_2d = b1.reshape(1, HID_DIM).astype(jnp.float32)                  # (1, 128)
    w2_p = jnp.pad(w2_t.astype(jnp.float32), ((0, 0), (0, OUT_PAD - OUT_DIM)))  # (128, 128)

    out_padded = pl.pallas_call(
        mnist_mlp_kernel,
        out_shape=jax.ShapeDtypeStruct((B_pad, OUT_PAD), jnp.float32),
        grid_spec=pltpu.PrefetchScalarGridSpec(
            num_scalar_prefetch=0,
            grid=(num_tiles,),
            in_specs=[
                # Batch-tiled activations: new block each grid step.
                pl.BlockSpec((TB, IN_PAD), lambda i: (i, 0)),
                # Weights/bias: constant index_map -> stay resident in VMEM.
                pl.BlockSpec((IN_PAD, HID_DIM), lambda i: (0, 0)),
                pl.BlockSpec((1, HID_DIM), lambda i: (0, 0)),
                pl.BlockSpec((HID_DIM, OUT_PAD), lambda i: (0, 0)),
            ],
            out_specs=pl.BlockSpec((TB, OUT_PAD), lambda i: (i, 0)),
        ),
        compiler_params=pltpu.CompilerParams(
            # Independent batch tiles -> shard across TensorCores on v7x.
            dimension_semantics=("parallel",),
        ),
    )(x_p, w1_p, b1_2d, w2_p)

    return out_padded[:B, :OUT_DIM]


def _reference(x, w1_t, b1, w2_t):
    """Pure-JAX reference matching the kernel's bf16-input / f32-accum math."""
    B = x.shape[0]
    x2d = x.reshape(B, IN_DIM).astype(jnp.bfloat16).astype(jnp.float32)
    w1 = w1_t.astype(jnp.bfloat16).astype(jnp.float32)
    h = jnp.tanh(x2d @ w1 + b1[None, :])
    logits = h @ w2_t.astype(jnp.float32)
    return jax.nn.log_softmax(logits, axis=-1)


if __name__ == "__main__":
    key = jax.random.PRNGKey(0)
    k_x, k_w1, k_b1, k_w2 = jax.random.split(key, 4)

    B = 2
    # Deterministic synthetic parameters (stored pre-transposed:
    # w1_t = fc1.weight.T, w2_t = fc2.weight.T).
    x = jax.random.normal(k_x, (B, 1, 28, 28), dtype=jnp.float32)
    w1_t = jax.random.normal(k_w1, (IN_DIM, HID_DIM), dtype=jnp.float32) * 0.03
    b1 = jax.random.normal(k_b1, (HID_DIM,), dtype=jnp.float32) * 0.01
    w2_t = jax.random.normal(k_w2, (HID_DIM, OUT_DIM), dtype=jnp.float32) * 0.08

    out = mnist_mlp_forward(x, w1_t, b1, w2_t)
    out = jax.block_until_ready(out)

    ref = _reference(x, w1_t, b1, w2_t)
    assert out.shape == (B, OUT_DIM), out.shape
    assert jnp.allclose(out, ref, atol=1e-3, rtol=1e-3), (
        float(jnp.max(jnp.abs(out - ref)))
    )
    print("KERNEL_OK")
</pallas_src>

<mosaic_0001>
module attributes {stable_mosaic.version = 11 : i64} {
  func.func @mnist_mlp_kernel(%arg0: i32, %arg1: memref<8x896xbf16, #tpu.memory_space<vmem>>, %arg2: memref<896x128xbf16, #tpu.memory_space<vmem>>, %arg3: memref<1x128xf32, #tpu.memory_space<vmem>>, %arg4: memref<128x128xf32, #tpu.memory_space<vmem>>, %arg5: memref<8x128xf32, #tpu.memory_space<vmem>>) attributes {dimension_semantics = [#tpu.dimension_semantics<parallel>], iteration_bounds = array<i64: 1>, scalar_prefetch = 0 : i64, scratch_operands = 0 : i64, tpu.core_type = #tpu.core_type<tc>, window_params = [{transform_indices = @transform_0, window_bounds = array<i64: 8, 896>}, {pipeline_mode = #tpu.pipeline_mode<synchronous>, transform_indices = @transform_1, window_bounds = array<i64: 896, 128>}, {pipeline_mode = #tpu.pipeline_mode<synchronous>, transform_indices = @transform_2, window_bounds = array<i64: 1, 128>}, {pipeline_mode = #tpu.pipeline_mode<synchronous>, transform_indices = @transform_3, window_bounds = array<i64: 128, 128>}, {transform_indices = @transform_4, window_bounds = array<i64: 8, 128>}]} {
    %c0 = arith.constant 0 : index
    %c0_0 = arith.constant 0 : index
    %0 = vector.load %arg1[%c0, %c0_0] : memref<8x896xbf16, #tpu.memory_space<vmem>>, vector<8x896xbf16>
    %c0_1 = arith.constant 0 : index
    %c0_2 = arith.constant 0 : index
    %1 = vector.load %arg2[%c0_1, %c0_2] : memref<896x128xbf16, #tpu.memory_space<vmem>>, vector<896x128xbf16>
    %cst = arith.constant dense<0.000000e+00> : vector<8x128xf32>
    %2 = tpu.matmul %0, %1, %cst {dimension_numbers = #tpu.dot_dimension_numbers<[1], [0], [0], [1], [0, 0, 1, 1], [], []>} : vector<8x896xbf16>, vector<896x128xbf16>, vector<8x128xf32> -> vector<8x128xf32>
    %c0_3 = arith.constant 0 : index
    %c0_4 = arith.constant 0 : index
    %3 = vector.load %arg3[%c0_3, %c0_4] : memref<1x128xf32, #tpu.memory_space<vmem>>, vector<1x128xf32>
    %4 = vector.broadcast %3 : vector<1x128xf32> to vector<8x128xf32>
    %5 = arith.addf %2, %4 : vector<8x128xf32>
    %6 = math.tanh %5 : vector<8x128xf32>
    %c0_5 = arith.constant 0 : index
    %c0_6 = arith.constant 0 : index
    %7 = vector.load %arg4[%c0_5, %c0_6] : memref<128x128xf32, #tpu.memory_space<vmem>>, vector<128x128xf32>
    %cst_7 = arith.constant dense<0.000000e+00> : vector<8x128xf32>
    %8 = tpu.matmul %6, %7, %cst_7 {dimension_numbers = #tpu.dot_dimension_numbers<[1], [0], [0], [1], [0, 0, 1, 1], [], []>} : vector<8x128xf32>, vector<128x128xf32>, vector<8x128xf32> -> vector<8x128xf32>
    %9 = tpu.iota {dimensions = array<i32: 1>} : vector<8x128xi32>
    %c10_i32 = arith.constant 10 : i32
    %10 = vector.broadcast %c10_i32 : i32 to vector<8x128xi32>
    %11 = arith.cmpi slt, %9, %10 : vector<8x128xi32>
    %cst_8 = arith.constant -1.000000e+30 : f32
    %12 = vector.broadcast %cst_8 : f32 to vector<8x128xf32>
    %13 = arith.select %11, %8, %12 : vector<8x128xi1>, vector<8x128xf32>
    %cst_9 = arith.constant dense<0xFF800000> : vector<8xf32>
    %14 = vector.multi_reduction <maximumf>, %13, %cst_9 [1] : vector<8x128xf32> to vector<8xf32>
    %15 = vector.shape_cast %14 : vector<8xf32> to vector<8x1xf32>
    %16 = vector.broadcast %15 : vector<8x1xf32> to vector<8x128xf32>
    %17 = arith.subf %13, %16 : vector<8x128xf32>
    %18 = math.exp %17 : vector<8x128xf32>
    %cst_10 = arith.constant dense<0.000000e+00> : vector<8xf32>
    %19 = vector.multi_reduction <add>, %18, %cst_10 [1] : vector<8x128xf32> to vector<8xf32>
    %20 = vector.shape_cast %19 : vector<8xf32> to vector<8x1xf32>
    %21 = math.log %20 : vector<8x1xf32>
    %22 = vector.broadcast %21 : vector<8x1xf32> to vector<8x128xf32>
    %23 = arith.subf %17, %22 : vector<8x128xf32>
    %c0_11 = arith.constant 0 : index
    %c0_12 = arith.constant 0 : index
    %24 = vector.load %arg5[%c0_11, %c0_12] : memref<8x128xf32, #tpu.memory_space<vmem>>, vector<8x128xf32>
    tpu.vector_store %arg5[%c0_11, %c0_12], %23 {strides = array<i32>} : memref<8x128xf32, #tpu.memory_space<vmem>>, vector<8x128xf32>,
    return
  }
  func.func @transform_0(%arg0: i32) -> (i32, i32) {
    %c0_i32 = arith.constant 0 : i32
    %c0_i32_0 = arith.constant 0 : i32
    return %arg0, %c0_i32 : i32, i32
  }
  func.func @transform_1(%arg0: i32) -> (i32, i32) {
    %c0_i32 = arith.constant 0 : i32
    %c0_i32_0 = arith.constant 0 : i32
    %c0_i32_1 = arith.constant 0 : i32
    return %c0_i32, %c0_i32_0 : i32, i32
  }
  func.func @transform_2(%arg0: i32) -> (i32, i32) {
    %c0_i32 = arith.constant 0 : i32
    %c0_i32_0 = arith.constant 0 : i32
    %c0_i32_1 = arith.constant 0 : i32
    return %c0_i32, %c0_i32_0 : i32, i32
  }
  func.func @transform_3(%arg0: i32) -> (i32, i32) {
    %c0_i32 = arith.constant 0 : i32
    %c0_i32_0 = arith.constant 0 : i32
    %c0_i32_1 = arith.constant 0 : i32
    return %c0_i32, %c0_i32_0 : i32, i32
  }
  func.func @transform_4(%arg0: i32) -> (i32, i32) {
    %c0_i32 = arith.constant 0 : i32
    %c0_i32_0 = arith.constant 0 : i32
    return %arg0, %c0_i32 : i32, i32
  }
}

</mosaic_0001>

<llo_original>
// kernel: tpu_custom_call.1
$region0: #{tpu_custom_call.1}
  #allocation0 [shape = 'u32[]', space=smem, size = 0x4, offset = 0x4, fixed_abs, tag = 'smem constant byte address 0x4 - core index']
  #allocation1 [shape = 'u32[144,128]{1,0:T(1,128)}', space=vmem, size = 0x12000, scoped, tag = 'internal scratch']
  %s0 = inlined_call_operand.hbm [shape: bf16[8,896], index: 0, kind: input, shape index: {}]
  %s1 = inlined_call_operand.hbm [shape: bf16[896,128], index: 1, kind: input, shape index: {}]
  %s2 = inlined_call_operand.vmem [shape: f32[1,128], index: 2, kind: input, shape index: {}]
  %s3 = inlined_call_operand.hbm [shape: f32[128,128], index: 3, kind: input, shape index: {}]
  %s4 = inlined_call_operand.hbm [shape: f32[8,128], index: 4, kind: output, shape index: {}]
  %s5 = sld [smem:[#allocation0]]
  $region38: #{tpu_custom_call.1} parent=0
    _
  %s7 = ssub.s32 1, %s5
  %s8 = scalar_select 0, %s7, %s5
  $region1: #{tpu_custom_call.1} parent=0
    #allocation2 [shape = 'u8[14336]{0}', space=vmem, size = 0x3800, scoped, tag = 'input window, operand 0, single buffered']
    #allocation3 [shape = 's32[1]{0}', space=sflag, size = 0x4, scoped, tag = 'scoped memory for tpu_custom_call.1']
    #allocation4 [shape = 's32[1]{0}', space=sflag, size = 0x4, scoped, tag = 'scoped memory for tpu_custom_call.1']
    #allocation5 [shape = 'u8[229376]{0}', space=vmem, size = 0x38000, scoped, tag = 'input window, operand 1, single buffered']
    #allocation6 [shape = 's32[1]{0}', space=sflag, size = 0x4, scoped, tag = 'scoped memory for tpu_custom_call.1']
    #allocation7 [shape = 'u8[65536]{0}', space=vmem, size = 0x10000, scoped, tag = 'input window, operand 3, single buffered']
    #allocation8 [shape = 'u8[4096]{0}', space=vmem, size = 0x1000, scoped, tag = 'output window, operand 0, single buffered']
    %9 = vsyncpa [#allocation3], 0
    %10 = vsyncpa [#allocation6], 0
    %11 = vsyncpa [#allocation4], 0
    // Predicated region
    $region2: #{tpu_custom_call.1} parent=1 // pred_check
      _
    $region3: #{tpu_custom_call.1} parent=1 // pred_check_branch
      %13 = sbr.rel (0) target = $region5
    $region4: #{tpu_custom_call.1} parent=1 // pred_region
      %s15 = ssub.s32 448, 448
      %16 = vsyncadd [#allocation3], %s15
      %s18 = sshll.u32 [#allocation2], 4
      %s19 = int_to_ptr.vmem [resolvable:$true] %s18
      %21 = dma.hbm_to_vmem [thread:$0]  %s0, 448, %s19, [#allocation3]
    $region5: #{tpu_custom_call.1} parent=1 // pred_fallthru
      _
    // Predicated region
    $region6: #{tpu_custom_call.1} parent=1 // pred_check
      _
    $region7: #{tpu_custom_call.1} parent=1 // pred_check_branch
      %23 = sbr.rel (0) target = $region9
    $region8: #{tpu_custom_call.1} parent=1 // pred_region
      %s25 = ssub.s32 7168, 7168
      %26 = vsyncadd [#allocation6], %s25
      %s27 = sshll.u32 [#allocation5], 4
      %s28 = int_to_ptr.vmem [resolvable:$true] %s27
      %33 = dma.hbm_to_vmem [thread:$0]  %s1, 7168, %s28, [#allocation6], 64, 64, 4
    $region9: #{tpu_custom_call.1} parent=1 // pred_fallthru
      _
    // Predicated region
    $region10: #{tpu_custom_call.1} parent=1 // pred_check
      _
    $region11: #{tpu_custom_call.1} parent=1 // pred_check_branch
      %35 = sbr.rel (0) target = $region13
    $region12: #{tpu_custom_call.1} parent=1 // pred_region
      _
    $region13: #{tpu_custom_call.1} parent=1 // pred_fallthru
      _
    // Predicated region
    $region14: #{tpu_custom_call.1} parent=1 // pred_check
      _
    $region15: #{tpu_custom_call.1} parent=1 // pred_check_branch
      %37 = sbr.rel (0) target = $region17
    $region16: #{tpu_custom_call.1} parent=1 // pred_region
      %s39 = ssub.s32 2048, 2048
      %40 = vsyncadd [#allocation6], %s39
      %s41 = sshll.u32 [#allocation7], 4
      %s42 = int_to_ptr.vmem [resolvable:$true] %s41
      %47 = dma.hbm_to_vmem [thread:$0]  %s3, 2048, %s42, [#allocation6], 128, 128, 8
    $region17: #{tpu_custom_call.1} parent=1 // pred_fallthru
      _
    // Predicated region
    $region18: #{tpu_custom_call.1} parent=1 // pred_check
      _
    $region19: #{tpu_custom_call.1} parent=1 // pred_check_branch
      %49 = sbr.rel (0) target = $region21
    $region20: #{tpu_custom_call.1} parent=1 // pred_region
      %50 = dma.done [#allocation3], 448
    $region21: #{tpu_custom_call.1} parent=1 // pred_fallthru
      _
    // Predicated region
    $region22: #{tpu_custom_call.1} parent=1 // pred_check
      _
    $region23: #{tpu_custom_call.1} parent=1 // pred_check_branch
      %52 = sbr.rel (0) target = $region25
    $region24: #{tpu_custom_call.1} parent=1 // pred_region
      %53 = dma.done [#allocation6], 7168
    $region25: #{tpu_custom_call.1} parent=1 // pred_fallthru
      _
    // Predicated region
    $region26: #{tpu_custom_call.1} parent=1 // pred_check
      _
    $region27: #{tpu_custom_call.1} parent=1 // pred_check_branch
      %55 = sbr.rel (0) target = $region29
    $region28: #{tpu_custom_call.1} parent=1 // pred_region
      %56 = dma.done [#allocation6], 2048
    $region29: #{tpu_custom_call.1} parent=1 // pred_fallthru
      _
    %v58 = vld [vmem:[#allocation2] sm:$0xff]
    %v59 = vld [vmem:[#allocation2 + $0x8] sm:$0xff]
    %v60 = vld [vmem:[#allocation2 + $0x10] sm:$0xff]
    %v61 = vld [vmem:[#allocation2 + $0x18] sm:$0xf]
    %v62 = vld [vmem:[#allocation5] sm:$0xf]
    %v63 = vld [vmem:[#allocation5 + $0x4] sm:$0xf]
    %v64 = vld [vmem:[#allocation5 + $0x8] sm:$0xf]
    %v65 = vld [vmem:[#allocation5 + $0xc] sm:$0xf]
    %v66 = vld [vmem:[#allocation5 + $0x10] sm:$0xf]
    %v67 = vld [vmem:[#allocation5 + $0x14] sm:$0xf]
    %v68 = vld [vmem:[#allocation5 + $0x18] sm:$0xf]
    %v69 = vld [vmem:[#allocation5 + $0x1c] sm:$0xf]
    %v70 = vld [vmem:[#allocation5 + $0x20] sm:$0xf]
    %v71 = vld [vmem:[#allocation5 + $0x24] sm:$0xf]
    %v72 = vld [vmem:[#allocation5 + $0x28] sm:$0xf]
    %v73 = vld [vmem:[#allocation5 + $0x2c] sm:$0xf]
    %v74 = vld [vmem:[#allocation5 + $0x30] sm:$0xf]
    %v75 = vld [vmem:[#allocation5 + $0x34] sm:$0xf]
    %v76 = vld [vmem:[#allocation5 + $0x38] sm:$0xf]
    %v77 = vld [vmem:[#allocation5 + $0x3c] sm:$0xf]
    %v78 = vld [vmem:[#allocation5 + $0x40] sm:$0xf]
    %v79 = vld [vmem:[#allocation5 + $0x44] sm:$0xf]
    %v80 = vld [vmem:[#allocation5 + $0x48] sm:$0xf]
    %v81 = vld [vmem:[#allocation5 + $0x4c] sm:$0xf]
    %v82 = vld [vmem:[#allocation5 + $0x50] sm:$0xf]
    %v83 = vld [vmem:[#allocation5 + $0x54] sm:$0xf]
    %v84 = vld [vmem:[#allocation5 + $0x58] sm:$0xf]
    %v85 = vld [vmem:[#allocation5 + $0x5c] sm:$0xf]
    %v86 = vld [vmem:[#allocation5 + $0x60] sm:$0xf]
    %v87 = vld [vmem:[#allocation5 + $0x64] sm:$0xf]
    %v88 = vld [vmem:[#allocation5 + $0x68] sm:$0xf]
    %v89 = vld [vmem:[#allocation5 + $0x6c] sm:$0xf]
    %v90 = vld [vmem:[#allocation5 + $0x70] sm:$0xf]
    %v91 = vld [vmem:[#allocation5 + $0x74] sm:$0xf]
    %v92 = vld [vmem:[#allocation5 + $0x78] sm:$0xf]
    %v93 = vld [vmem:[#allocation5 + $0x7c] sm:$0xf]
    %v94 = vld [vmem:[#allocation5 + $0x80] sm:$0xf]
    %v95 = vld [vmem:[#allocation5 + $0x84] sm:$0xf]
    %v96 = vld [vmem:[#allocation5 + $0x88] sm:$0xf]
    %v97 = vld [vmem:[#allocation5 + $0x8c] sm:$0xf]
    %v98 = vld [vmem:[#allocation5 + $0x90] sm:$0xf]
    %v99 = vld [vmem:[#allocation5 + $0x94] sm:$0xf]
    %v100 = vld [vmem:[#allocation5 + $0x98] sm:$0xf]
    %v101 = vld [vmem:[#allocation5 + $0x9c] sm:$0xf]
    %v102 = vld [vmem:[#allocation5 + $0xa0] sm:$0xf]
    %v103 = vld [vmem:[#allocation5 + $0xa4] sm:$0xf]
    %v104 = vld [vmem:[#allocation5 + $0xa8] sm:$0xf]
    %v105 = vld [vmem:[#allocation5 + $0xac] sm:$0xf]
    %v106 = vld [vmem:[#allocation5 + $0xb0] sm:$0xf]
    %v107 = vld [vmem:[#allocation5 + $0xb4] sm:$0xf]
    %v108 = vld [vmem:[#allocation5 + $0xb8] sm:$0xf]
    %v109 = vld [vmem:[#allocation5 + $0xbc] sm:$0xf]
    %v110 = vld [vmem:[#allocation5 + $0xc0] sm:$0xf]
    %v111 = vld [vmem:[#allocation5 + $0xc4] sm:$0xf]
    %v112 = vld [vmem:[#allocation5 + $0xc8] sm:$0xf]
    %v113 = vld [vmem:[#allocation5 + $0xcc] sm:$0xf]
    %v114 = vld [vmem:[#allocation5 + $0xd0] sm:$0xf]
    %v115 = vld [vmem:[#allocation5 + $0xd4] sm:$0xf]
    %v116 = vld [vmem:[#allocation5 + $0xd8] sm:$0xf]
    %v117 = vld [vmem:[#allocation5 + $0xdc] sm:$0xf]
    %v118 = vld [vmem:[#allocation5 + $0xe0] sm:$0xf]
    %v119 = vld [vmem:[#allocation5 + $0xe4] sm:$0xf]
    %v120 = vld [vmem:[#allocation5 + $0xe8] sm:$0xf]
    %v121 = vld [vmem:[#allocation5 + $0xec] sm:$0xf]
    %v122 = vld [vmem:[#allocation5 + $0xf0] sm:$0xf]
    %v123 = vld [vmem:[#allocation5 + $0xf4] sm:$0xf]
    %v124 = vld [vmem:[#allocation5 + $0xf8] sm:$0xf]
    %v125 = vld [vmem:[#allocation5 + $0xfc] sm:$0xf]
    %v126 = vld [vmem:[#allocation5 + $0x100] sm:$0xf]
    %v127 = vld [vmem:[#allocation5 + $0x104] sm:$0xf]
    %v128 = vld [vmem:[#allocation5 + $0x108] sm:$0xf]
    %v129 = vld [vmem:[#allocation5 + $0x10c] sm:$0xf]
    %v130 = vld [vmem:[#allocation5 + $0x110] sm:$0xf]
    %v131 = vld [vmem:[#allocation5 + $0x114] sm:$0xf]
    %v132 = vld [vmem:[#allocation5 + $0x118] sm:$0xf]
    %v133 = vld [vmem:[#allocation5 + $0x11c] sm:$0xf]
    %v134 = vld [vmem:[#allocation5 + $0x120] sm:$0xf]
    %v135 = vld [vmem:[#allocation5 + $0x124] sm:$0xf]
    %v136 = vld [vmem:[#allocation5 + $0x128] sm:$0xf]
    %v137 = vld [vmem:[#allocation5 + $0x12c] sm:$0xf]
    %v138 = vld [vmem:[#allocation5 + $0x130] sm:$0xf]
    %v139 = vld [vmem:[#allocation5 + $0x134] sm:$0xf]
    %v140 = vld [vmem:[#allocation5 + $0x138] sm:$0xf]
    %v141 = vld [vmem:[#allocation5 + $0x13c] sm:$0xf]
    %v142 = vld [vmem:[#allocation5 + $0x140] sm:$0xf]
    %v143 = vld [vmem:[#allocation5 + $0x144] sm:$0xf]
    %v144 = vld [vmem:[#allocation5 + $0x148] sm:$0xf]
    %v145 = vld [vmem:[#allocation5 + $0x14c] sm:$0xf]
    %v146 = vld [vmem:[#allocation5 + $0x150] sm:$0xf]
    %v147 = vld [vmem:[#allocation5 + $0x154] sm:$0xf]
    %v148 = vld [vmem:[#allocation5 + $0x158] sm:$0xf]
    %v149 = vld [vmem:[#allocation5 + $0x15c] sm:$0xf]
    %v150 = vld [vmem:[#allocation5 + $0x160] sm:$0xf]
    %v151 = vld [vmem:[#allocation5 + $0x164] sm:$0xf]
    %v152 = vld [vmem:[#allocation5 + $0x168] sm:$0xf]
    %v153 = vld [vmem:[#allocation5 + $0x16c] sm:$0xf]
    %v154 = vld [vmem:[#allocation5 + $0x170] sm:$0xf]
    %v155 = vld [vmem:[#allocation5 + $0x174] sm:$0xf]
    %v156 = vld [vmem:[#allocation5 + $0x178] sm:$0xf]
    %v157 = vld [vmem:[#allocation5 + $0x17c] sm:$0xf]
    %v158 = vld [vmem:[#allocation5 + $0x180] sm:$0xf]
    %v159 = vld [vmem:[#allocation5 + $0x184] sm:$0xf]
    %v160 = vld [vmem:[#allocation5 + $0x188] sm:$0xf]
    %v161 = vld [vmem:[#allocation5 + $0x18c] sm:$0xf]
    %v162 = vld [vmem:[#allocation5 + $0x190] sm:$0xf]
    %v163 = vld [vmem:[#allocation5 + $0x194] sm:$0xf]
    %v164 = vld [vmem:[#allocation5 + $0x198] sm:$0xf]
    %v165 = vld [vmem:[#allocation5 + $0x19c] sm:$0xf]
    %v166 = vld [vmem:[#allocation5 + $0x1a0] sm:$0xf]
    %v167 = vld [vmem:[#allocation5 + $0x1a4] sm:$0xf]
    %v168 = vld [vmem:[#allocation5 + $0x1a8] sm:$0xf]
    %v169 = vld [vmem:[#allocation5 + $0x1ac] sm:$0xf]
    %v170 = vld [vmem:[#allocation5 + $0x1b0] sm:$0xf]
    %v171 = vld [vmem:[#allocation5 + $0x1b4] sm:$0xf]
    %v172 = vld [vmem:[#allocation5 + $0x1b8] sm:$0xf]
    %v173 = vld [vmem:[#allocation5 + $0x1bc] sm:$0xf]
    %v174 = vld [vmem:[%s2] sm:$0x1]
    %v176 = vlaneseq
    %v177 = vshrl.u32 %v176, 7
    %v178 = vsub.s32 0, %v177
    %v179 = vrot.slane %v174, %v178
    %v185 = vunpack.c.l.b16 %v58
    %v186 = vunpack.c.h.b16 %v58
    %v187 = vunpack.c.l.b16 %v59
    %v188 = vunpack.c.h.b16 %v59
    %v189 = vunpack.c.l.b16 %v60
    %v190 = vunpack.c.h.b16 %v60
    %v191 = vunpack.c.l.b16 %v61
    %v192 = vpack.c.b16 %v185, %v185
    %v193 = vpack.c.b16 %v186, %v186
    %v194 = vpack.c.b16 %v187, %v187
    %v195 = vpack.c.b16 %v188, %v188
    %v196 = vpack.c.b16 %v189, %v189
    %v197 = vpack.c.b16 %v190, %v190
    %v198 = vpack.c.b16 %v191, %v191
    %v318 = vunpack.c.l.b16 %v62
    %v319 = vunpack.c.l.b16 %v63
    %v320 = vunpack.c.l.b16 %v64
    %v321 = vunpack.c.l.b16 %v65
    %v322 = vunpack.c.l.b16 %v66
    %v323 = vunpack.c.l.b16 %v67
    %v324 = vunpack.c.l.b16 %v68
    %v325 = vunpack.c.l.b16 %v69
    %v326 = vunpack.c.l.b16 %v70
    %v327 = vunpack.c.l.b16 %v71
    %v328 = vunpack.c.l.b16 %v72
    %v329 = vunpack.c.l.b16 %v73
    %v330 = vunpack.c.l.b16 %v74
    %v331 = vunpack.c.l.b16 %v75
    %v332 = vunpack.c.l.b16 %v76
    %v333 = vunpack.c.l.b16 %v77
    %v334 = vunpack.c.l.b16 %v78
    %v335 = vunpack.c.l.b16 %v79
    %v336 = vunpack.c.l.b16 %v80
    %v337 = vunpack.c.l.b16 %v81
    %v338 = vunpack.c.l.b16 %v82
    %v339 = vunpack.c.l.b16 %v83
    %v340 = vunpack.c.l.b16 %v84
    %v341 = vunpack.c.l.b16 %v85
    %v342 = vunpack.c.l.b16 %v86
    %v343 = vunpack.c.l.b16 %v87
    %v344 = vunpack.c.l.b16 %v88
    %v345 = vunpack.c.l.b16 %v89
    %v346 = vunpack.c.l.b16 %v90
    %v347 = vunpack.c.l.b16 %v91
    %v348 = vunpack.c.l.b16 %v92
    %v349 = vunpack.c.l.b16 %v93
    %v350 = vunpack.c.l.b16 %v94
    %v351 = vunpack.c.l.b16 %v95
    %v352 = vunpack.c.l.b16 %v96
    %v353 = vunpack.c.l.b16 %v97
    %v354 = vunpack.c.l.b16 %v98
    %v355 = vunpack.c.l.b16 %v99
    %v356 = vunpack.c.l.b16 %v100
    %v357 = vunpack.c.l.b16 %v101
    %v358 = vunpack.c.l.b16 %v102
    %v359 = vunpack.c.l.b16 %v103
    %v360 = vunpack.c.l.b16 %v104
    %v361 = vunpack.c.l.b16 %v105
    %v362 = vunpack.c.l.b16 %v106
    %v363 = vunpack.c.l.b16 %v107
    %v364 = vunpack.c.l.b16 %v108
    %v365 = vunpack.c.l.b16 %v109
    %v366 = vunpack.c.l.b16 %v110
    %v367 = vunpack.c.l.b16 %v111
    %v368 = vunpack.c.l.b16 %v112
    %v369 = vunpack.c.l.b16 %v113
    %v370 = vunpack.c.l.b16 %v114
    %v371 = vunpack.c.l.b16 %v115
    %v372 = vunpack.c.l.b16 %v116
    %v373 = vunpack.c.l.b16 %v117
    %v374 = vunpack.c.l.b16 %v118
    %v375 = vunpack.c.l.b16 %v119
    %v376 = vunpack.c.l.b16 %v120
    %v377 = vunpack.c.l.b16 %v121
    %v378 = vunpack.c.l.b16 %v122
    %v379 = vunpack.c.l.b16 %v123
    %v380 = vunpack.c.l.b16 %v124
    %v381 = vunpack.c.l.b16 %v125
    %v382 = vunpack.c.l.b16 %v126
    %v383 = vunpack.c.l.b16 %v127
    %v384 = vunpack.c.l.b16 %v128
    %v385 = vunpack.c.l.b16 %v129
    %v386 = vunpack.c.l.b16 %v130
    %v387 = vunpack.c.l.b16 %v131
    %v388 = vunpack.c.l.b16 %v132
    %v389 = vunpack.c.l.b16 %v133
    %v390 = vunpack.c.l.b16 %v134
    %v391 = vunpack.c.l.b16 %v135
    %v392 = vunpack.c.l.b16 %v136
    %v393 = vunpack.c.l.b16 %v137
    %v394 = vunpack.c.l.b16 %v138
    %v395 = vunpack.c.l.b16 %v139
    %v396 = vunpack.c.l.b16 %v140
    %v397 = vunpack.c.l.b16 %v141
    %v398 = vunpack.c.l.b16 %v142
    %v399 = vunpack.c.l.b16 %v143
    %v400 = vunpack.c.l.b16 %v144
    %v401 = vunpack.c.l.b16 %v145
    %v402 = vunpack.c.l.b16 %v146
    %v403 = vunpack.c.l.b16 %v147
    %v404 = vunpack.c.l.b16 %v148
    %v405 = vunpack.c.l.b16 %v149
    %v406 = vunpack.c.l.b16 %v150
    %v407 = vunpack.c.l.b16 %v151
    %v408 = vunpack.c.l.b16 %v152
    %v409 = vunpack.c.l.b16 %v153
    %v410 = vunpack.c.l.b16 %v154
    %v411 = vunpack.c.l.b16 %v155
    %v412 = vunpack.c.l.b16 %v156
    %v413 = vunpack.c.l.b16 %v157
    %v414 = vunpack.c.l.b16 %v158
    %v415 = vunpack.c.l.b16 %v159
    %v416 = vunpack.c.l.b16 %v160
    %v417 = vunpack.c.l.b16 %v161
    %v418 = vunpack.c.l.b16 %v162
    %v419 = vunpack.c.l.b16 %v163
    %v420 = vunpack.c.l.b16 %v164
    %v421 = vunpack.c.l.b16 %v165
    %v422 = vunpack.c.l.b16 %v166
    %v423 = vunpack.c.l.b16 %v167
    %v424 = vunpack.c.l.b16 %v168
    %v425 = vunpack.c.l.b16 %v169
    %v426 = vunpack.c.l.b16 %v170
    %v427 = vunpack.c.l.b16 %v171
    %v428 = vunpack.c.l.b16 %v172
    %v429 = vunpack.c.l.b16 %v173
    %v430 = vpack.c.b16 %v319, %v318
    %v431 = vpack.c.b16 %v321, %v320
    %v432 = vpack.c.b16 %v323, %v322
    %v433 = vpack.c.b16 %v325, %v324
    %v434 = vpack.c.b16 %v327, %v326
    %v435 = vpack.c.b16 %v329, %v328
    %v436 = vpack.c.b16 %v331, %v330
    %v437 = vpack.c.b16 %v333, %v332
    %v438 = vpack.c.b16 %v335, %v334
    %v439 = vpack.c.b16 %v337, %v336
    %v440 = vpack.c.b16 %v339, %v338
    %v441 = vpack.c.b16 %v341, %v340
    %v442 = vpack.c.b16 %v343, %v342
    %v443 = vpack.c.b16 %v345, %v344
    %v444 = vpack.c.b16 %v347, %v346
    %v445 = vpack.c.b16 %v349, %v348
    %v446 = vpack.c.b16 %v351, %v350
    %v447 = vpack.c.b16 %v353, %v352
    %v448 = vpack.c.b16 %v355, %v354
    %v449 = vpack.c.b16 %v357, %v356
    %v450 = vpack.c.b16 %v359, %v358
    %v451 = vpack.c.b16 %v361, %v360
    %v452 = vpack.c.b16 %v363, %v362
    %v453 = vpack.c.b16 %v365, %v364
    %v454 = vpack.c.b16 %v367, %v366
    %v455 = vpack.c.b16 %v369, %v368
    %v456 = vpack.c.b16 %v371, %v370
    %v457 = vpack.c.b16 %v373, %v372
    %v458 = vpack.c.b16 %v375, %v374
    %v459 = vpack.c.b16 %v377, %v376
    %v460 = vpack.c.b16 %v379, %v378
    %v461 = vpack.c.b16 %v381, %v380
    %v462 = vpack.c.b16 %v383, %v382
    %v463 = vpack.c.b16 %v385, %v384
    %v464 = vpack.c.b16 %v387, %v386
    %v465 = vpack.c.b16 %v389, %v388
    %v466 = vpack.c.b16 %v391, %v390
    %v467 = vpack.c.b16 %v393, %v392
    %v468 = vpack.c.b16 %v395, %v394
    %v469 = vpack.c.b16 %v397, %v396
    %v470 = vpack.c.b16 %v399, %v398
    %v471 = vpack.c.b16 %v401, %v400
    %v472 = vpack.c.b16 %v403, %v402
    %v473 = vpack.c.b16 %v405, %v404
    %v474 = vpack.c.b16 %v407, %v406
    %v475 = vpack.c.b16 %v409, %v408
    %v476 = vpack.c.b16 %v411, %v410
    %v477 = vpack.c.b16 %v413, %v412
    %v478 = vpack.c.b16 %v415, %v414
    %v479 = vpack.c.b16 %v417, %v416
    %v480 = vpack.c.b16 %v419, %v418
    %v481 = vpack.c.b16 %v421, %v420
    %v482 = vpack.c.b16 %v423, %v422
    %v483 = vpack.c.b16 %v425, %v424
    %v484 = vpack.c.b16 %v427, %v426
    %v485 = vpack.c.b16 %v429, %v428
    %542 = vmatprep.subr.bf16.mxu0 0
    %543 = vmatpush1.bf16.msra.mxu0 %v437
    %544 = vmatprep.subr.bf16.mxu0 0
    %545 = vmatpush1.bf16.msra.mxu0 %v436
    %546 = vmatprep.subr.bf16.mxu0 0
    %547 = vmatpush1.bf16.msra.mxu0 %v435
    %548 = vmatprep.subr.bf16.mxu0 0
    %549 = vmatpush1.bf16.msra.mxu0 %v434
    %550 = vmatprep.subr.bf16.mxu0 0
    %551 = vmatpush1.bf16.msra.mxu0 %v433
    %552 = vmatprep.subr.bf16.mxu0 0
    %553 = vmatpush1.bf16.msra.mxu0 %v432
    %554 = vmatprep.subr.bf16.mxu0 0
    %555 = vmatpush1.bf16.msra.mxu0 %v431
    %556 = vmatprep.subr.bf16.mxu0 0
    %557 = vmatpush1.bf16.msra.mxu0 %v430
    %558 = vmatprep.subr.bf16.mxu0 0
    %559 = vmatpush2.bf16.msra.mxu0 %v445
    %560 = vmatprep.subr.bf16.mxu0 0
    %561 = vmatpush2.bf16.msra.mxu0 %v444
    %562 = vmatprep.subr.bf16.mxu0 0
    %563 = vmatpush2.bf16.msra.mxu0 %v443
    %564 = vmatprep.subr.bf16.mxu0 0
    %565 = vmatpush2.bf16.msra.mxu0 %v442
    %566 = vmatprep.subr.bf16.mxu0 0
    %567 = vmatpush2.bf16.msra.mxu0 %v441
    %568 = vmatprep.subr.bf16.mxu0 0
    %569 = vmatpush2.bf16.msra.mxu0 %v440
    %570 = vmatprep.subr.bf16.mxu0 0
    %571 = vmatpush2.bf16.msra.mxu0 %v439
    %572 = vmatprep.subr.bf16.mxu0 0
    %573 = vmatpush2.bf16.msra.mxu0 %v438
    %574 = vmatprep.mubr.bf16.mxu0 %v193
    %575 = vmatmul.mubr.bf16.gmra.mxu0 %v192
    %v576 = vpop.f32.mrf.mxu0
    %v577 = vadd.f32 %v179, %v576
    %v578 = vpop.f32.mrf.mxu0
    %v579 = vpop.f32.mrf.mxu0
    %v580 = vpop.f32.mrf.mxu0
    %581 = vdwg.mxu0
    %582 = vmatprep.subr.bf16.mxu0 0
    %583 = vmatpush1.bf16.msra.mxu0 %v453
    %584 = vmatprep.subr.bf16.mxu0 0
    %585 = vmatpush1.bf16.msra.mxu0 %v452
    %586 = vmatprep.subr.bf16.mxu0 0
    %587 = vmatpush1.bf16.msra.mxu0 %v451
    %588 = vmatprep.subr.bf16.mxu0 0
    %589 = vmatpush1.bf16.msra.mxu0 %v450
    %590 = vmatprep.subr.bf16.mxu0 0
    %591 = vmatpush1.bf16.msra.mxu0 %v449
    %592 = vmatprep.subr.bf16.mxu0 0
    %593 = vmatpush1.bf16.msra.mxu0 %v448
    %594 = vmatprep.subr.bf16.mxu0 0
    %595 = vmatpush1.bf16.msra.mxu0 %v447
    %596 = vmatprep.subr.bf16.mxu0 0
    %597 = vmatpush1.bf16.msra.mxu0 %v446
    %598 = vmatprep.subr.bf16.mxu0 0
    %599 = vmatpush2.bf16.msra.mxu0 %v461
    %600 = vmatprep.subr.bf16.mxu0 0
    %601 = vmatpush2.bf16.msra.mxu0 %v460
    %602 = vmatprep.subr.bf16.mxu0 0
    %603 = vmatpush2.bf16.msra.mxu0 %v459
    %604 = vmatprep.subr.bf16.mxu0 0
    %605 = vmatpush2.bf16.msra.mxu0 %v458
    %606 = vmatprep.subr.bf16.mxu0 0
    %607 = vmatpush2.bf16.msra.mxu0 %v457
    %608 = vmatprep.subr.bf16.mxu0 0
    %609 = vmatpush2.bf16.msra.mxu0 %v456
    %610 = vmatprep.subr.bf16.mxu0 0
    %611 = vmatpush2.bf16.msra.mxu0 %v455
    %612 = vmatprep.subr.bf16.mxu0 0
    %613 = vmatpush2.bf16.msra.mxu0 %v454
    %614 = vmatprep.mubr.bf16.mxu0 %v195
    %615 = vmatmul.mubr.bf16.gmra.mxu0 %v194
    %v616 = vpop.f32.mrf.mxu0
    %v617 = vadd.f32 %v577, %v616
    %v618 = vpop.f32.mrf.mxu0
    %v619 = vpop.f32.mrf.mxu0
    %v620 = vpop.f32.mrf.mxu0
    %621 = vdwg.mxu0
    %622 = vmatprep.subr.bf16.mxu0 0
    %623 = vmatpush1.bf16.msra.mxu0 %v469
    %624 = vmatprep.subr.bf16.mxu0 0
    %625 = vmatpush1.bf16.msra.mxu0 %v468
    %626 = vmatprep.subr.bf16.mxu0 0
    %627 = vmatpush1.bf16.msra.mxu0 %v467
    %628 = vmatprep.subr.bf16.mxu0 0
    %629 = vmatpush1.bf16.msra.mxu0 %v466
    %630 = vmatprep.subr.bf16.mxu0 0
    %631 = vmatpush1.bf16.msra.mxu0 %v465
    %632 = vmatprep.subr.bf16.mxu0 0
    %633 = vmatpush1.bf16.msra.mxu0 %v464
    %634 = vmatprep.subr.bf16.mxu0 0
    %635 = vmatpush1.bf16.msra.mxu0 %v463
    %636 = vmatprep.subr.bf16.mxu0 0
    %637 = vmatpush1.bf16.msra.mxu0 %v462
    %638 = vmatprep.subr.bf16.mxu0 0
    %639 = vmatpush2.bf16.msra.mxu0 %v477
    %640 = vmatprep.subr.bf16.mxu0 0
    %641 = vmatpush2.bf16.msra.mxu0 %v476
    %642 = vmatprep.subr.bf16.mxu0 0
    %643 = vmatpush2.bf16.msra.mxu0 %v475
    %644 = vmatprep.subr.bf16.mxu0 0
    %645 = vmatpush2.bf16.msra.mxu0 %v474
    %646 = vmatprep.subr.bf16.mxu0 0
    %647 = vmatpush2.bf16.msra.mxu0 %v473
    %648 = vmatprep.subr.bf16.mxu0 0
    %649 = vmatpush2.bf16.msra.mxu0 %v472
    %650 = vmatprep.subr.bf16.mxu0 0
    %651 = vmatpush2.bf16.msra.mxu0 %v471
    %652 = vmatprep.subr.bf16.mxu0 0
    %653 = vmatpush2.bf16.msra.mxu0 %v470
    %654 = vmatprep.mubr.bf16.mxu0 %v197
    %655 = vmatmul.mubr.bf16.gmra.mxu0 %v196
    %v656 = vpop.f32.mrf.mxu0
    %v657 = vadd.f32 %v617, %v656
    %v658 = vpop.f32.mrf.mxu0
    %v659 = vpop.f32.mrf.mxu0
    %v660 = vpop.f32.mrf.mxu0
    %661 = vdwg.mxu0
    %662 = vmatprep.subr.bf16.mxu0 0
    %663 = vmatpush1.bf16.msra.mxu0 %v485
    %664 = vmatprep.subr.bf16.mxu0 0
    %665 = vmatpush1.bf16.msra.mxu0 %v484
    %666 = vmatprep.subr.bf16.mxu0 0
    %667 = vmatpush1.bf16.msra.mxu0 %v483
    %668 = vmatprep.subr.bf16.mxu0 0
    %669 = vmatpush1.bf16.msra.mxu0 %v482
    %670 = vmatprep.subr.bf16.mxu0 0
    %671 = vmatpush1.bf16.msra.mxu0 %v481
    %672 = vmatprep.subr.bf16.mxu0 0
    %673 = vmatpush1.bf16.msra.mxu0 %v480
    %674 = vmatprep.subr.bf16.mxu0 0
    %675 = vmatpush1.bf16.msra.mxu0 %v479
    %676 = vmatprep.subr.bf16.mxu0 0
    %677 = vmatpush1.bf16.msra.mxu0 %v478
    %678 = vmatprep.subr.bf16.mxu0 0
    %679 = vmatpush2.bf16.msra.mxu0 0
    %680 = vmatprep.subr.bf16.mxu0 0
    %681 = vmatpush2.bf16.msra.mxu0 0
    %682 = vmatprep.subr.bf16.mxu0 0
    %683 = vmatpush2.bf16.msra.mxu0 0
    %684 = vmatprep.subr.bf16.mxu0 0
    %685 = vmatpush2.bf16.msra.mxu0 0
    %686 = vmatprep.subr.bf16.mxu0 0
    %687 = vmatpush2.bf16.msra.mxu0 0
    %688 = vmatprep.subr.bf16.mxu0 0
    %689 = vmatpush2.bf16.msra.mxu0 0
    %690 = vmatprep.subr.bf16.mxu0 0
    %691 = vmatpush2.bf16.msra.mxu0 0
    %692 = vmatprep.subr.bf16.mxu0 0
    %693 = vmatpush2.bf16.msra.mxu0 0
    %694 = vmatprep.mubr.bf16.mxu0 0
    %695 = vmatmul.mubr.bf16.gmra.mxu0 %v198
    %v696 = vpop.f32.mrf.mxu0
    %v697 = vadd.f32 %v657, %v696
    %v698 = vpop.f32.mrf.mxu0
    %v699 = vpop.f32.mrf.mxu0
    %v700 = vpop.f32.mrf.mxu0
    %701 = vdwg.mxu0
    %v702 = vtanh.pop %v697
    %v703 = vld [vmem:[#allocation7] sm:$0xff]
    %v704 = vld [vmem:[#allocation7 + $0x8] sm:$0xff]
    %v705 = vld [vmem:[#allocation7 + $0x10] sm:$0xff]
    %v706 = vld [vmem:[#allocation7 + $0x18] sm:$0xff]
    %v707 = vld [vmem:[#allocation7 + $0x20] sm:$0xff]
    %v708 = vld [vmem:[#allocation7 + $0x28] sm:$0xff]
    %v709 = vld [vmem:[#allocation7 + $0x30] sm:$0xff]
    %v710 = vld [vmem:[#allocation7 + $0x38] sm:$0xff]
    %v711 = vld [vmem:[#allocation7 + $0x40] sm:$0xff]
    %v712 = vld [vmem:[#allocation7 + $0x48] sm:$0xff]
    %v713 = vld [vmem:[#allocation7 + $0x50] sm:$0xff]
    %v714 = vld [vmem:[#allocation7 + $0x58] sm:$0xff]
    %v715 = vld [vmem:[#allocation7 + $0x60] sm:$0xff]
    %v716 = vld [vmem:[#allocation7 + $0x68] sm:$0xff]
    %v717 = vld [vmem:[#allocation7 + $0x70] sm:$0xff]
    %v718 = vld [vmem:[#allocation7 + $0x78] sm:$0xff]
    %719 = vmatprep.subr.mxu0 0.0
    %720 = vmatpush1.msra.mxu0 %v718
    %721 = vmatprep.subr.mxu0 0.0
    %722 = vmatpush1.msra.mxu0 %v717
    %723 = vmatprep.subr.mxu0 0.0
    %724 = vmatpush1.msra.mxu0 %v716
    %725 = vmatprep.subr.mxu0 0.0
    %726 = vmatpush1.msra.mxu0 %v715
    %727 = vmatprep.subr.mxu0 0.0
    %728 = vmatpush1.msra.mxu0 %v714
    %729 = vmatprep.subr.mxu0 0.0
    %730 = vmatpush1.msra.mxu0 %v713
    %731 = vmatprep.subr.mxu0 0.0
    %732 = vmatpush1.msra.mxu0 %v712
    %733 = vmatprep.subr.mxu0 0.0
    %734 = vmatpush1.msra.mxu0 %v711
    %735 = vmatprep.subr.mxu0 0.0
    %736 = vmatpush1.msra.mxu0 %v710
    %737 = vmatprep.subr.mxu0 0.0
    %738 = vmatpush1.msra.mxu0 %v709
    %739 = vmatprep.subr.mxu0 0.0
    %740 = vmatpush1.msra.mxu0 %v708
    %741 = vmatprep.subr.mxu0 0.0
    %742 = vmatpush1.msra.mxu0 %v707
    %743 = vmatprep.subr.mxu0 0.0
    %744 = vmatpush1.msra.mxu0 %v706
    %745 = vmatprep.subr.mxu0 0.0
    %746 = vmatpush1.msra.mxu0 %v705
    %747 = vmatprep.subr.mxu0 0.0
    %748 = vmatpush1.msra.mxu0 %v704
    %749 = vmatprep.subr.mxu0 0.0
    %750 = vmatpush1.msra.mxu0 %v703
    %751 = vmatprep.subr.mxu0 0.0
    %752 = vmatpush2.msra.mxu0 0.0
    %753 = vmatprep.subr.mxu0 0.0
    %754 = vmatpush2.msra.mxu0 0.0
    %755 = vmatprep.subr.mxu0 0.0
    %756 = vmatpush2.msra.mxu0 0.0
    %757 = vmatprep.subr.mxu0 0.0
    %758 = vmatpush2.msra.mxu0 0.0
    %759 = vmatprep.subr.mxu0 0.0
    %760 = vmatpush2.msra.mxu0 0.0
    %761 = vmatprep.subr.mxu0 0.0
    %762 = vmatpush2.msra.mxu0 0.0
    %763 = vmatprep.subr.mxu0 0.0
    %764 = vmatpush2.msra.mxu0 0.0
    %765 = vmatprep.subr.mxu0 0.0
    %766 = vmatpush2.msra.mxu0 0.0
    %767 = vmatprep.subr.mxu0 0.0
    %768 = vmatpush2.msra.mxu0 0.0
    %769 = vmatprep.subr.mxu0 0.0
    %770 = vmatpush2.msra.mxu0 0.0
    %771 = vmatprep.subr.mxu0 0.0
    %772 = vmatpush2.msra.mxu0 0.0
    %773 = vmatprep.subr.mxu0 0.0
    %774 = vmatpush2.msra.mxu0 0.0
    %775 = vmatprep.subr.mxu0 0.0
    %776 = vmatpush2.msra.mxu0 0.0
    %777 = vmatprep.subr.mxu0 0.0
    %778 = vmatpush2.msra.mxu0 0.0
    %779 = vmatprep.subr.mxu0 0.0
    %780 = vmatpush2.msra.mxu0 0.0
    %781 = vmatprep.subr.mxu0 0.0
    %782 = vmatpush2.msra.mxu0 0.0
    %783 = vmatprep.mubr.f32.mxu0 0.0
    %784 = vmatmul.mubr.f32.gmra.mxu0 %v702
    %v785 = vpop.f32.mrf.mxu0
    %v786 = vadd.f32 0.0, %v785
    %v787 = vpop.f32.mrf.mxu0
    %788 = vdwg.mxu0
    %v789 = vlaneseq
    %v790 = vand.u32 %v789, 127
    %vm791 = vcmp.lt.s32.totalorder %v790, 10
    %v792 = vsel %vm791, %v786, -1e+30
    %793 = vmax.xlane.f32.xlu0 %v792
    %v794 = vpop.xlane.xlu0 %793
    %v795 = vsub.f32 %v792, %v794
    %v796 = vmul.f32 %v795, 1.442695
    %v797 = vpow.pop %v796
    %798 = vadd.xlane.f32.xlu0 %v797
    %v799 = vpop.xlane.xlu0 %798
    %v800 = vlog2.pop %v799
    %v801 = vmul.f32 %v800, 0.6931472
    %v802 = vsub.f32 %v795, %v801
    %803 = vst [vmem:[#allocation8] sm:$0xff] %v802
    // Predicated region
    $region30: #{tpu_custom_call.1} parent=1 // pred_check
      _
    $region31: #{tpu_custom_call.1} parent=1 // pred_check_branch
      %805 = sbr.rel (0) target = $region33
    $region32: #{tpu_custom_call.1} parent=1 // pred_region
      %s807 = ssub.s32 128, 128
      %808 = vsyncadd [#allocation4], %s807
      %s810 = sshll.u32 [#allocation8], 4
      %s811 = int_to_ptr.vmem [resolvable:$true] %s810
      %813 = dma.vmem_to_hbm [thread:$0]  %s811, 128, %s4, [#allocation4]
    $region33: #{tpu_custom_call.1} parent=1 // pred_fallthru
      _
    // Predicated region
    $region34: #{tpu_custom_call.1} parent=1 // pred_check
      _
    $region35: #{tpu_custom_call.1} parent=1 // pred_check_branch
      %815 = sbr.rel (0) target = $region37
    $region36: #{tpu_custom_call.1} parent=1 // pred_region
      %816 = dma.done [#allocation4], 128
    $region37: #{tpu_custom_call.1} parent=1 // pred_fallthru
      _
    %817 = vsyncpa [#allocation3], 1
    %818 = vsyncpa [#allocation6], 1
    %819 = vsyncpa [#allocation4], 1

</llo_original>
